<compile_context>
chip_gen: v7x
topology: tpu7x:2x2x1
jax: 0.10.0
libtpu: 0.0.40
codegen_flags: <defaults>
</compile_context>

<pallas_src>
import jax
import jax.numpy as jnp
from jax.experimental import pallas as pl
from jax.experimental.pallas import tpu as pltpu

LN_EPS = 1e-5
_SQRT_HALF = 0.7071067811865476


def _round_up(a, b):
    return ((a + b - 1) // b) * b


def _sublane_multiple(dtype):
    # f32 -> 8, bf16 -> 16, int8/fp8 -> 32 (packed-sublane alignment).
    return max(8, 32 // jnp.dtype(dtype).itemsize)


def _vmem_capacity_bytes():
    try:
        return int(pltpu.get_tpu_info().vmem_capacity_bytes)
    except Exception:
        return 64 * 1024 * 1024  # conservative fallback (v7x per-TC VMEM)


def _lm_head_kernel(x_ref, wd_ref, gamma_ref, beta_ref, wo_ref, bias_ref,
                    o_ref, ln_ref):
    # x_ref: (TM, E)    wd_ref: (E, E) = W_dense^T     gamma/beta: (1, E)
    # wo_ref: (E, TV) = W_out^T tile   bias_ref: (1, TV)
    # o_ref: (TM, TV)   ln_ref (scratch): (TM, E) cached LayerNorm output

    @pl.when(pl.program_id(1) == 0)
    def _compute_dense_gelu_ln():
        x = x_ref[...]
        # dense (no bias): x @ W_dense^T, weights pre-transposed -> plain dot.
        h = jnp.dot(x, wd_ref[...], preferred_element_type=jnp.float32)
        # Exact-erf GELU (torch.nn.GELU default), on the f32 accumulator.
        h = 0.5 * h * (1.0 + jax.lax.erf(h * jnp.float32(_SQRT_HALF)))
        # LayerNorm over last dim in f32 (matches `.float()` in the module).
        mean = jnp.mean(h, axis=-1, keepdims=True)
        c = h - mean
        var = jnp.mean(c * c, axis=-1, keepdims=True)
        inv = jax.lax.rsqrt(var + LN_EPS)
        ln = (c * inv * gamma_ref[...].astype(jnp.float32)
              + beta_ref[...].astype(jnp.float32))
        ln_ref[...] = ln.astype(ln_ref.dtype)          # `.type_as(x)`

    # Readout for this vocab tile: ln @ W_out^T tile + bias tile (pure MXU).
    y = jnp.dot(ln_ref[...], wo_ref[...], preferred_element_type=jnp.float32)
    y = y + bias_ref[...].astype(jnp.float32)
    o_ref[...] = y.astype(o_ref.dtype)


def prepare_lm_head_params(w_dense, gamma, beta, w_out, b_out, *,
                           tile_v=2048, compute_dtype=None):
    """One-time weight preparation (call at parameter init, NOT per forward).

    w_dense: [E, E] (PyTorch out x in), w_out: [V, E], gamma/beta: [E], b_out: [V].
    Pre-transposes weights, pads the vocab dim to a multiple of the vocab tile,
    and optionally casts matmul operands to `compute_dtype` (e.g. bf16).
    `tile_v` should be a power-of-two multiple of 128.
    """
    E = w_dense.shape[1]
    V = w_out.shape[0]
    tv = min(_round_up(tile_v, 128), _round_up(V, 128))
    v_pad = _round_up(V, tv)

    wd_t = jnp.asarray(w_dense).T                       # [E_in, E_out]
    wo_t = jnp.asarray(w_out).T                         # [E, V]
    bias = jnp.asarray(b_out)
    if v_pad != V:
        wo_t = jnp.pad(wo_t, ((0, 0), (0, v_pad - V)))
        bias = jnp.pad(bias, ((0, v_pad - V),))
    if compute_dtype is not None:
        wd_t = wd_t.astype(compute_dtype)
        wo_t = wo_t.astype(compute_dtype)
    return dict(
        wd_t=wd_t,
        gamma=jnp.asarray(gamma).reshape(1, E),
        beta=jnp.asarray(beta).reshape(1, E),
        wo_t=wo_t,
        bias=bias.reshape(1, v_pad),
        tile_v=tv,
        vocab=V,
        compute_dtype=compute_dtype,
    )


def roberta_lm_head(x, params, *, tile_m=512):
    """x: [B, S, E]; params: output of prepare_lm_head_params."""
    B, S, E = x.shape
    V = params["vocab"]
    wd_t, wo_t = params["wd_t"], params["wo_t"]
    gamma2, beta2, bias2 = params["gamma"], params["beta"], params["bias"]
    v_pad = wo_t.shape[1]
    compute_dtype = params["compute_dtype"] or x.dtype
    out_dtype = x.dtype
    N = B * S

    x2 = x.reshape(N, E).astype(compute_dtype)

    x_isz = jnp.dtype(compute_dtype).itemsize
    w_isz = jnp.dtype(wo_t.dtype).itemsize
    out_isz = jnp.dtype(out_dtype).itemsize

    sub = _sublane_multiple(compute_dtype)
    tm = min(_round_up(tile_m, sub), _round_up(N, sub))
    tv = min(params["tile_v"], v_pad)

    # Per-generation VMEM budget (128 MiB v5e/v6e, 64 MiB v7x) with headroom.
    cap = _vmem_capacity_bytes()
    budget = max(32 * 1024 * 1024, cap - 8 * 1024 * 1024)

    def vmem_bytes(tm_, tv_):
        return (2 * tm_ * E * x_isz          # x row tile (double-buffered)
                + 2 * E * E * w_isz          # dense weight (resident)
                + 2 * E * tv_ * w_isz        # readout weight tile
                + 2 * tv_ * 4                # bias tile
                + 2 * tm_ * tv_ * out_isz    # output tile
                + tm_ * E * x_isz            # cached LN scratch
                + 4 * E * 4)                 # gamma / beta

    # Auto-shrink tiles until they fit the budget.
    while vmem_bytes(tm, tv) > budget and (tm > sub or tv > 128):
        if tv >= tm and tv > 128:
            tv = max(128, (tv // 2) // 128 * 128)
        elif tm > sub:
            tm = max(sub, (tm // 2) // sub * sub)
        else:
            tv = max(128, (tv // 2) // 128 * 128)
    if v_pad % tv != 0:  # keep tv a 128-multiple divisor of the padded vocab
        tv = max(d for d in range(128, tv + 1, 128) if v_pad % d == 0)

    n_pad = _round_up(N, tm)
    if n_pad != N:
        x2 = jnp.pad(x2, ((0, n_pad - N), (0, 0)))

    grid = (n_pad // tm, v_pad // tv)

    cost = pl.CostEstimate(
        flops=int(2 * N * E * E + 2 * N * E * v_pad),
        transcendentals=int(N * E),
        bytes_accessed=int(
            n_pad * E * x_isz                       # activations in
            + E * E * w_isz                         # dense weight (read once)
            + grid[0] * E * v_pad * w_isz           # W_out re-streamed per row tile
            + v_pad * 4 + 4 * E * 4                 # bias + gamma/beta
            + n_pad * v_pad * out_isz),             # logits out
    )

    vmem_limit = int(min(budget,
                         max(32 * 1024 * 1024,
                             vmem_bytes(tm, tv) + 4 * 1024 * 1024)))

    out = pl.pallas_call(
        _lm_head_kernel,
        out_shape=jax.ShapeDtypeStruct((n_pad, v_pad), out_dtype),
        grid_spec=pltpu.PrefetchScalarGridSpec(
            num_scalar_prefetch=0,
            grid=grid,
            in_specs=[
                pl.BlockSpec((tm, E), lambda i, j: (i, 0)),   # activation rows
                pl.BlockSpec((E, E), lambda i, j: (0, 0)),    # W_dense^T (resident)
                pl.BlockSpec((1, E), lambda i, j: (0, 0)),    # LN gamma
                pl.BlockSpec((1, E), lambda i, j: (0, 0)),    # LN beta
                pl.BlockSpec((E, tv), lambda i, j: (0, j)),   # W_out^T vocab tile
                pl.BlockSpec((1, tv), lambda i, j: (0, j)),   # bias vocab tile
            ],
            out_specs=pl.BlockSpec((tm, tv), lambda i, j: (i, j)),
            scratch_shapes=[pltpu.VMEM((tm, E), compute_dtype)],  # cached LN out
        ),
        compiler_params=pltpu.CompilerParams(
            dimension_semantics=("parallel", "arbitrary"),
            vmem_limit_bytes=vmem_limit),
        cost_estimate=cost,
    )(x2, wd_t, gamma2, beta2, wo_t, bias2)

    return out[:N, :V].reshape(B, S, V)


def _reference(x, w_dense, gamma, beta, w_out, b_out):
    h = x @ w_dense.T
    h = 0.5 * h * (1.0 + jax.lax.erf(h / jnp.sqrt(2.0)))
    h32 = h.astype(jnp.float32)
    mean = jnp.mean(h32, axis=-1, keepdims=True)
    var = jnp.mean((h32 - mean) ** 2, axis=-1, keepdims=True)
    ln = (h32 - mean) / jnp.sqrt(var + LN_EPS) * gamma + beta
    ln = ln.astype(x.dtype)
    return ln @ w_out.T + b_out


if __name__ == "__main__":
    B, S, E, V = 2, 8, 32, 64  # batch, seq, embed_dim, output_dim

    key = jax.random.PRNGKey(0)
    kx, kd, ko, kb = jax.random.split(key, 4)

    x = jax.random.normal(kx, (B, S, E), dtype=jnp.float32)
    w_dense = jax.random.normal(kd, (E, E), dtype=jnp.float32) * (1.0 / jnp.sqrt(E))
    gamma = jnp.ones((E,), dtype=jnp.float32)
    beta = jnp.zeros((E,), dtype=jnp.float32)
    w_out = jax.random.normal(ko, (V, E), dtype=jnp.float32) * (1.0 / jnp.sqrt(E))
    b_out = jax.random.normal(kb, (V,), dtype=jnp.float32) * 0.01

    # One-time weight prep (transpose / pad / optional bf16 cast), then forward.
    params = prepare_lm_head_params(w_dense, gamma, beta, w_out, b_out,
                                    tile_v=2048, compute_dtype=None)
    y = roberta_lm_head(x, params, tile_m=512)
    jax.block_until_ready(y)

    y_ref = _reference(x, w_dense, gamma, beta, w_out, b_out)
    assert y.shape == (B, S, V)
    assert jnp.allclose(y, y_ref, atol=1e-4, rtol=1e-4), "mismatch vs reference"

    print("KERNEL_OK")
</pallas_src>

<mosaic_0001>
module attributes {stable_mosaic.version = 11 : i64} {
  func.func @_lm_head_kernel(%arg0: i32, %arg1: i32, %arg2: memref<16x32xf32, #tpu.memory_space<vmem>>, %arg3: memref<32x32xf32, #tpu.memory_space<vmem>>, %arg4: memref<1x32xf32, #tpu.memory_space<vmem>>, %arg5: memref<1x32xf32, #tpu.memory_space<vmem>>, %arg6: memref<32x128xf32, #tpu.memory_space<vmem>>, %arg7: memref<1x128xf32, #tpu.memory_space<vmem>>, %arg8: memref<16x128xf32, #tpu.memory_space<vmem>>, %arg9: memref<16x32xf32, #tpu.memory_space<vmem>>) attributes {dimension_semantics = [#tpu.dimension_semantics<parallel>, #tpu.dimension_semantics<arbitrary>], iteration_bounds = array<i64: 1, 1>, scalar_prefetch = 0 : i64, scratch_operands = 1 : i64, tpu.core_type = #tpu.core_type<tc>, window_params = [{transform_indices = @transform_0, window_bounds = array<i64: 16, 32>}, {pipeline_mode = #tpu.pipeline_mode<synchronous>, transform_indices = @transform_1, window_bounds = array<i64: 32, 32>}, {pipeline_mode = #tpu.pipeline_mode<synchronous>, transform_indices = @transform_2, window_bounds = array<i64: 1, 32>}, {pipeline_mode = #tpu.pipeline_mode<synchronous>, transform_indices = @transform_3, window_bounds = array<i64: 1, 32>}, {transform_indices = @transform_4, window_bounds = array<i64: 32, 128>}, {transform_indices = @transform_5, window_bounds = array<i64: 1, 128>}, {transform_indices = @transform_6, window_bounds = array<i64: 16, 128>}]} {
    %c0_i32 = arith.constant 0 : i32
    %0 = arith.cmpi eq, %arg1, %c0_i32 : i32
    %1 = arith.extui %0 : i1 to i32
    %c0_i32_0 = arith.constant 0 : i32
    %2 = arith.cmpi ne, %1, %c0_i32_0 : i32
    scf.if %2 {
      %c0_8 = arith.constant 0 : index
      %c0_9 = arith.constant 0 : index
      %10 = vector.load %arg2[%c0_8, %c0_9] : memref<16x32xf32, #tpu.memory_space<vmem>>, vector<16x32xf32>
      %c0_10 = arith.constant 0 : index
      %c0_11 = arith.constant 0 : index
      %11 = vector.load %arg3[%c0_10, %c0_11] : memref<32x32xf32, #tpu.memory_space<vmem>>, vector<32x32xf32>
      %cst_12 = arith.constant dense<0.000000e+00> : vector<16x32xf32>
      %12 = tpu.matmul %10, %11, %cst_12 {dimension_numbers = #tpu.dot_dimension_numbers<[1], [0], [0], [1], [0, 0, 1, 1], [], []>} : vector<16x32xf32>, vector<32x32xf32>, vector<16x32xf32> -> vector<16x32xf32>
      %cst_13 = arith.constant 5.000000e-01 : f32
      %13 = vector.broadcast %cst_13 : f32 to vector<16x32xf32>
      %14 = arith.mulf %13, %12 : vector<16x32xf32>
      %cst_14 = arith.constant 0.707106769 : f32
      %15 = vector.broadcast %cst_14 : f32 to vector<16x32xf32>
      %16 = arith.mulf %12, %15 : vector<16x32xf32>
      %17 = math.erf %16 : vector<16x32xf32>
      %cst_15 = arith.constant 1.000000e+00 : f32
      %18 = vector.broadcast %cst_15 : f32 to vector<16x32xf32>
      %19 = arith.addf %18, %17 : vector<16x32xf32>
      %20 = arith.mulf %14, %19 : vector<16x32xf32>
      %cst_16 = arith.constant dense<0.000000e+00> : vector<16xf32>
      %21 = vector.multi_reduction <add>, %20, %cst_16 [1] : vector<16x32xf32> to vector<16xf32>
      %22 = vector.shape_cast %21 : vector<16xf32> to vector<16x1xf32>
      %cst_17 = arith.constant 3.200000e+01 : f32
      %23 = vector.broadcast %cst_17 : f32 to vector<16x1xf32>
      %24 = arith.divf %22, %23 : vector<16x1xf32>
      %25 = vector.broadcast %24 : vector<16x1xf32> to vector<16x32xf32>
      %26 = arith.subf %20, %25 : vector<16x32xf32>
      %27 = arith.mulf %26, %26 : vector<16x32xf32>
      %cst_18 = arith.constant dense<0.000000e+00> : vector<16xf32>
      %28 = vector.multi_reduction <add>, %27, %cst_18 [1] : vector<16x32xf32> to vector<16xf32>
      %29 = vector.shape_cast %28 : vector<16xf32> to vector<16x1xf32>
      %cst_19 = arith.constant 3.200000e+01 : f32
      %30 = vector.broadcast %cst_19 : f32 to vector<16x1xf32>
      %31 = arith.divf %29, %30 : vector<16x1xf32>
      %cst_20 = arith.constant 9.99999974E-6 : f32
      %32 = vector.broadcast %cst_20 : f32 to vector<16x1xf32>
      %33 = arith.addf %31, %32 : vector<16x1xf32>
      %34 = math.rsqrt %33 : vector<16x1xf32>
      %35 = vector.broadcast %34 : vector<16x1xf32> to vector<16x32xf32>
      %36 = arith.mulf %26, %35 : vector<16x32xf32>
      %c0_21 = arith.constant 0 : index
      %c0_22 = arith.constant 0 : index
      %37 = vector.load %arg4[%c0_21, %c0_22] : memref<1x32xf32, #tpu.memory_space<vmem>>, vector<1x32xf32>
      %38 = vector.broadcast %37 : vector<1x32xf32> to vector<16x32xf32>
      %39 = arith.mulf %36, %38 : vector<16x32xf32>
      %c0_23 = arith.constant 0 : index
      %c0_24 = arith.constant 0 : index
      %40 = vector.load %arg5[%c0_23, %c0_24] : memref<1x32xf32, #tpu.memory_space<vmem>>, vector<1x32xf32>
      %41 = vector.broadcast %40 : vector<1x32xf32> to vector<16x32xf32>
      %42 = arith.addf %39, %41 : vector<16x32xf32>
      %c0_25 = arith.constant 0 : index
      %c0_26 = arith.constant 0 : index
      %43 = vector.load %arg9[%c0_25, %c0_26] : memref<16x32xf32, #tpu.memory_space<vmem>>, vector<16x32xf32>
      tpu.vector_store %arg9[%c0_25, %c0_26], %42 {strides = array<i32>} : memref<16x32xf32, #tpu.memory_space<vmem>>, vector<16x32xf32>,
    } else {
    }
    %c0 = arith.constant 0 : index
    %c0_1 = arith.constant 0 : index
    %3 = vector.load %arg9[%c0, %c0_1] : memref<16x32xf32, #tpu.memory_space<vmem>>, vector<16x32xf32>
    %c0_2 = arith.constant 0 : index
    %c0_3 = arith.constant 0 : index
    %4 = vector.load %arg6[%c0_2, %c0_3] : memref<32x128xf32, #tpu.memory_space<vmem>>, vector<32x128xf32>
    %cst = arith.constant dense<0.000000e+00> : vector<16x128xf32>
    %5 = tpu.matmul %3, %4, %cst {dimension_numbers = #tpu.dot_dimension_numbers<[1], [0], [0], [1], [0, 0, 1, 1], [], []>} : vector<16x32xf32>, vector<32x128xf32>, vector<16x128xf32> -> vector<16x128xf32>
    %c0_4 = arith.constant 0 : index
    %c0_5 = arith.constant 0 : index
    %6 = vector.load %arg7[%c0_4, %c0_5] : memref<1x128xf32, #tpu.memory_space<vmem>>, vector<1x128xf32>
    %7 = vector.broadcast %6 : vector<1x128xf32> to vector<16x128xf32>
    %8 = arith.addf %5, %7 : vector<16x128xf32>
    %c0_6 = arith.constant 0 : index
    %c0_7 = arith.constant 0 : index
    %9 = vector.load %arg8[%c0_6, %c0_7] : memref<16x128xf32, #tpu.memory_space<vmem>>, vector<16x128xf32>
    tpu.vector_store %arg8[%c0_6, %c0_7], %8 {strides = array<i32>} : memref<16x128xf32, #tpu.memory_space<vmem>>, vector<16x128xf32>,
    return
  }
  func.func @transform_0(%arg0: i32, %arg1: i32) -> (i32, i32) {
    %c0_i32 = arith.constant 0 : i32
    %c0_i32_0 = arith.constant 0 : i32
    return %arg0, %c0_i32 : i32, i32
  }
  func.func @transform_1(%arg0: i32, %arg1: i32) -> (i32, i32) {
    %c0_i32 = arith.constant 0 : i32
    %c0_i32_0 = arith.constant 0 : i32
    %c0_i32_1 = arith.constant 0 : i32
    return %c0_i32, %c0_i32_0 : i32, i32
  }
  func.func @transform_2(%arg0: i32, %arg1: i32) -> (i32, i32) {
    %c0_i32 = arith.constant 0 : i32
    %c0_i32_0 = arith.constant 0 : i32
    %c0_i32_1 = arith.constant 0 : i32
    return %c0_i32, %c0_i32_0 : i32, i32
  }
  func.func @transform_3(%arg0: i32, %arg1: i32) -> (i32, i32) {
    %c0_i32 = arith.constant 0 : i32
    %c0_i32_0 = arith.constant 0 : i32
    %c0_i32_1 = arith.constant 0 : i32
    return %c0_i32, %c0_i32_0 : i32, i32
  }
  func.func @transform_4(%arg0: i32, %arg1: i32) -> (i32, i32) {
    %c0_i32 = arith.constant 0 : i32
    %c0_i32_0 = arith.constant 0 : i32
    return %c0_i32, %arg1 : i32, i32
  }
  func.func @transform_5(%arg0: i32, %arg1: i32) -> (i32, i32) {
    %c0_i32 = arith.constant 0 : i32
    %c0_i32_0 = arith.constant 0 : i32
    return %c0_i32, %arg1 : i32, i32
  }
  func.func @transform_6(%arg0: i32, %arg1: i32) -> (i32, i32) {
    %c0_i32 = arith.constant 0 : i32
    return %arg0, %arg1 : i32, i32
  }
}

</mosaic_0001>

<llo_original>
// kernel: tpu_custom_call.1
$region0: #{tpu_custom_call.1}
  #allocation0 [shape = 'u32[]', space=smem, size = 0x4, offset = 0x4, fixed_abs, tag = 'smem constant byte address 0x4 - core index']
  #allocation1 [shape = 'u32[144,128]{1,0:T(1,128)}', space=vmem, size = 0x12000, scoped, tag = 'internal scratch']
  #allocation2 [shape = 'f32[16,32]{1,0:T(8,128)}', space=vmem, size = 0x2000, scoped, tag = 'scratch operand']
  %s0 = inlined_call_operand.hbm [shape: f32[16,32], index: 0, kind: input, shape index: {}]
  %s1 = inlined_call_operand.hbm [shape: f32[32,32], index: 1, kind: input, shape index: {}]
  %s2 = inlined_call_operand.vmem [shape: f32[1,32], index: 2, kind: input, shape index: {}]
  %s3 = inlined_call_operand.vmem [shape: f32[1,32], index: 3, kind: input, shape index: {}]
  %s4 = inlined_call_operand.hbm [shape: f32[32,128], index: 4, kind: input, shape index: {}]
  %s5 = inlined_call_operand.vmem [shape: f32[1,128], index: 5, kind: input, shape index: {}]
  %s6 = inlined_call_operand.hbm [shape: f32[16,128], index: 6, kind: output, shape index: {}]
  %s7 = sld [smem:[#allocation0]]
  $region50: #{tpu_custom_call.1} parent=0
    _
  %s9 = ssub.s32 1, %s7
  %s10 = scalar_select 0, %s9, %s7
  $region1: #{tpu_custom_call.1} parent=0
    #allocation3 [shape = 'u8[8192]{0}', space=vmem, size = 0x2000, scoped, tag = 'input window, operand 0, single buffered']
    #allocation4 [shape = 's32[1]{0}', space=sflag, size = 0x4, scoped, tag = 'scoped memory for tpu_custom_call.1']
    #allocation5 [shape = 's32[1]{0}', space=sflag, size = 0x4, scoped, tag = 'scoped memory for tpu_custom_call.1']
    #allocation6 [shape = 'u8[16384]{0}', space=vmem, size = 0x4000, scoped, tag = 'input window, operand 1, single buffered']
    #allocation7 [shape = 's32[1]{0}', space=sflag, size = 0x4, scoped, tag = 'scoped memory for tpu_custom_call.1']
    #allocation8 [shape = 'u8[16384]{0}', space=vmem, size = 0x4000, scoped, tag = 'input window, operand 4, single buffered']
    #allocation9 [shape = 'u8[8192]{0}', space=vmem, size = 0x2000, scoped, tag = 'output window, operand 0, single buffered']
    %11 = vsyncpa [#allocation4], 0
    %12 = vsyncpa [#allocation7], 0
    %13 = vsyncpa [#allocation5], 0
    // Predicated region
    $region2: #{tpu_custom_call.1} parent=1 // pred_check
      _
    $region3: #{tpu_custom_call.1} parent=1 // pred_check_branch
      %15 = sbr.rel (0) target = $region5
    $region4: #{tpu_custom_call.1} parent=1 // pred_region
      %s17 = ssub.s32 256, 256
      %18 = vsyncadd [#allocation4], %s17
      %s19 = sshll.u32 [#allocation3], 4
      %s20 = int_to_ptr.vmem [resolvable:$true] %s19
      %25 = dma.hbm_to_vmem [thread:$0]  %s0, 256, %s20, [#allocation4], 128, 128, 8
    $region5: #{tpu_custom_call.1} parent=1 // pred_fallthru
      _
    // Predicated region
    $region6: #{tpu_custom_call.1} parent=1 // pred_check
      _
    $region7: #{tpu_custom_call.1} parent=1 // pred_check_branch
      %27 = sbr.rel (0) target = $region9
    $region8: #{tpu_custom_call.1} parent=1 // pred_region
      %s29 = ssub.s32 512, 512
      %30 = vsyncadd [#allocation7], %s29
      %s31 = sshll.u32 [#allocation6], 4
      %s32 = int_to_ptr.vmem [resolvable:$true] %s31
      %37 = dma.hbm_to_vmem [thread:$0]  %s1, 512, %s32, [#allocation7], 128, 128, 8
    $region9: #{tpu_custom_call.1} parent=1 // pred_fallthru
      _
    // Predicated region
    $region10: #{tpu_custom_call.1} parent=1 // pred_check
      _
    $region11: #{tpu_custom_call.1} parent=1 // pred_check_branch
      %39 = sbr.rel (0) target = $region13
    $region12: #{tpu_custom_call.1} parent=1 // pred_region
      _
    $region13: #{tpu_custom_call.1} parent=1 // pred_fallthru
      _
    // Predicated region
    $region14: #{tpu_custom_call.1} parent=1 // pred_check
      _
    $region15: #{tpu_custom_call.1} parent=1 // pred_check_branch
      %41 = sbr.rel (0) target = $region17
    $region16: #{tpu_custom_call.1} parent=1 // pred_region
      _
    $region17: #{tpu_custom_call.1} parent=1 // pred_fallthru
      _
    // Predicated region
    $region18: #{tpu_custom_call.1} parent=1 // pred_check
      _
    $region19: #{tpu_custom_call.1} parent=1 // pred_check_branch
      %43 = sbr.rel (0) target = $region21
    $region20: #{tpu_custom_call.1} parent=1 // pred_region
      %s45 = ssub.s32 512, 512
      %46 = vsyncadd [#allocation7], %s45
      %s47 = sshll.u32 [#allocation8], 4
      %s48 = int_to_ptr.vmem [resolvable:$true] %s47
      %53 = dma.hbm_to_vmem [thread:$0]  %s4, 512, %s48, [#allocation7], 128, 128, 8
    $region21: #{tpu_custom_call.1} parent=1 // pred_fallthru
      _
    // Predicated region
    $region22: #{tpu_custom_call.1} parent=1 // pred_check
      _
    $region23: #{tpu_custom_call.1} parent=1 // pred_check_branch
      %55 = sbr.rel (0) target = $region25
    $region24: #{tpu_custom_call.1} parent=1 // pred_region
      _
    $region25: #{tpu_custom_call.1} parent=1 // pred_fallthru
      _
    // Predicated region
    $region26: #{tpu_custom_call.1} parent=1 // pred_check
      _
    $region27: #{tpu_custom_call.1} parent=1 // pred_check_branch
      %57 = sbr.rel (0) target = $region29
    $region28: #{tpu_custom_call.1} parent=1 // pred_region
      %58 = dma.done [#allocation4], 256
    $region29: #{tpu_custom_call.1} parent=1 // pred_fallthru
      _
    // Predicated region
    $region30: #{tpu_custom_call.1} parent=1 // pred_check
      _
    $region31: #{tpu_custom_call.1} parent=1 // pred_check_branch
      %60 = sbr.rel (0) target = $region33
    $region32: #{tpu_custom_call.1} parent=1 // pred_region
      %61 = dma.done [#allocation7], 512
    $region33: #{tpu_custom_call.1} parent=1 // pred_fallthru
      _
    // Predicated region
    $region34: #{tpu_custom_call.1} parent=1 // pred_check
      _
    $region35: #{tpu_custom_call.1} parent=1 // pred_check_branch
      %63 = sbr.rel (0) target = $region37
    $region36: #{tpu_custom_call.1} parent=1 // pred_region
      %64 = dma.done [#allocation7], 512
    $region37: #{tpu_custom_call.1} parent=1 // pred_fallthru
      _
    %p65 = scmp.eq.s32.totalorder 0, 0
    // Predicated region
    $region38: #{tpu_custom_call.1} parent=1 // pred_check
      %p66 = pneg %p65
    $region39: #{tpu_custom_call.1} parent=1 // pred_check_branch
      %68 = sbr.rel (%p66) target = $region41
    $region40: #{tpu_custom_call.1} parent=1 // pred_region
      %v69 = vld [vmem:[#allocation3] sm:$0xff]
      %v70 = vld [vmem:[#allocation3 + $0x8] sm:$0xff]
      %v71 = vld [vmem:[#allocation6] sm:$0xff]
      %v72 = vld [vmem:[#allocation6 + $0x8] sm:$0xff]
      %v73 = vld [vmem:[#allocation6 + $0x10] sm:$0xff]
      %v74 = vld [vmem:[#allocation6 + $0x18] sm:$0xff]
      %vm75 = vcmask 261120
      %v77 = vsel %vm75, %v69, 0
      %v80 = vsel %vm75, %v70, 0
      %82 = vmatprep.subr.mxu0 0.0
      %83 = vmatpush1.msra.mxu0 %v71
      %84 = vmatprep.subr.mxu0 0.0
      %85 = vmatpush1.msra.mxu0 %v72
      %86 = vmatprep.subr.mxu0 0.0
      %87 = vmatpush1.msra.mxu0 %v73
      %88 = vmatprep.subr.mxu0 0.0
      %89 = vmatpush1.msra.mxu0 %v74
      %90 = vmatprep.subr.mxu0 0.0
      %91 = vmatpush1.msra.mxu0 0.0
      %92 = vmatprep.subr.mxu0 0.0
      %93 = vmatpush1.msra.mxu0 0.0
      %94 = vmatprep.subr.mxu0 0.0
      %95 = vmatpush1.msra.mxu0 0.0
      %96 = vmatprep.subr.mxu0 0.0
      %97 = vmatpush1.msra.mxu0 0.0
      %98 = vmatprep.subr.mxu0 0.0
      %99 = vmatpush1.msra.mxu0 0.0
      %100 = vmatprep.subr.mxu0 0.0
      %101 = vmatpush1.msra.mxu0 0.0
      %102 = vmatprep.subr.mxu0 0.0
      %103 = vmatpush1.msra.mxu0 0.0
      %104 = vmatprep.subr.mxu0 0.0
      %105 = vmatpush1.msra.mxu0 0.0
      %106 = vmatprep.subr.mxu0 0.0
      %107 = vmatpush1.msra.mxu0 0.0
      %108 = vmatprep.subr.mxu0 0.0
      %109 = vmatpush1.msra.mxu0 0.0
      %110 = vmatprep.subr.mxu0 0.0
      %111 = vmatpush1.msra.mxu0 0.0
      %112 = vmatprep.subr.mxu0 0.0
      %113 = vmatpush1.msra.mxu0 0.0
      %114 = vmatprep.subr.mxu0 0.0
      %115 = vmatpush1.msra.mxu0 0.0
      %116 = vmatprep.subr.mxu0 0.0
      %117 = vmatpush1.msra.mxu0 0.0
      %118 = vmatprep.subr.mxu0 0.0
      %119 = vmatpush1.msra.mxu0 0.0
      %120 = vmatprep.subr.mxu0 0.0
      %121 = vmatpush1.msra.mxu0 0.0
      %122 = vmatprep.subr.mxu0 0.0
      %123 = vmatpush1.msra.mxu0 0.0
      %124 = vmatprep.subr.mxu0 0.0
      %125 = vmatpush1.msra.mxu0 0.0
      %126 = vmatprep.subr.mxu0 0.0
      %127 = vmatpush1.msra.mxu0 0.0
      %128 = vmatprep.subr.mxu0 0.0
      %129 = vmatpush1.msra.mxu0 0.0
      %130 = vmatprep.subr.mxu0 0.0
      %131 = vmatpush1.msra.mxu0 0.0
      %132 = vmatprep.subr.mxu0 0.0
      %133 = vmatpush1.msra.mxu0 0.0
      %134 = vmatprep.subr.mxu0 0.0
      %135 = vmatpush1.msra.mxu0 0.0
      %136 = vmatprep.subr.mxu0 0.0
      %137 = vmatpush1.msra.mxu0 0.0
      %138 = vmatprep.subr.mxu0 0.0
      %139 = vmatpush1.msra.mxu0 0.0
      %140 = vmatprep.subr.mxu0 0.0
      %141 = vmatpush1.msra.mxu0 0.0
      %142 = vmatprep.subr.mxu0 0.0
      %143 = vmatpush1.msra.mxu0 0.0
      %144 = vmatprep.subr.mxu0 0.0
      %145 = vmatpush1.msra.mxu0 0.0
      %146 = vmatprep.mubr.f32.mxu0 0.0
      %147 = vmatmul.mubr.f32.gmra.mrb[0].mxu0 %v77
      %v148 = vpop.f32.mrb[0].mxu0
      %v149 = vadd.f32 0.0, %v148
      %v150 = vpop.f32.mrb[0].mxu0
      %151 = vmatprep.mubr.f32.mxu0 0.0
      %152 = vmatmul.mubr.f32.gmra.mrb[0].mxu0 %v80
      %v153 = vpop.f32.mrb[0].mxu0
      %v154 = vadd.f32 0.0, %v153
      %v155 = vpop.f32.mrb[0].mxu0
      %156 = vdwg.mxu0
      %v157 = vmul.f32 %v149, 0.5
      %v158 = vmul.f32 %v154, 0.5
      %v159 = vmul.f32 %v149, 0.70710677
      %v160 = vmul.f32 %v154, 0.70710677
      %v161 = verf.f32.pop %v159
      %v162 = verf.f32.pop %v160
      %v163 = vadd.f32 %v161, 1.0
      %v164 = vadd.f32 %v162, 1.0
      %v165 = vmul.f32 %v157, %v163
      %v166 = vmul.f32 %v158, %v164
      %v167 = vsel %vm75, %v165, 0.0
      %168 = vadd.xlane.f32.xlu0 %v167
      %v169 = vpop.xlane.xlu0 %168
      %v170 = vsel %vm75, %v166, 0.0
      %171 = vadd.xlane.f32.xlu0 %v170
      %v172 = vpop.xlane.xlu0 %171
      %v173 = vrcp.pop 32.0
      %v174 = vmul.f32 %v169, %v173
      %v175 = vmul.f32 %v172, %v173
      %v176 = vsub.f32 %v165, %v174
      %v177 = vsub.f32 %v166, %v175
      %v178 = vmul.f32 %v176, %v176
      %v179 = vmul.f32 %v177, %v177
      %v180 = vsel %vm75, %v178, 0.0
      %181 = vadd.xlane.f32.xlu0 %v180
      %v182 = vpop.xlane.xlu0 %181
      %v183 = vsel %vm75, %v179, 0.0
      %184 = vadd.xlane.f32.xlu0 %v183
      %v185 = vpop.xlane.xlu0 %184
      %v186 = vmul.f32 %v182, %v173
      %v187 = vmul.f32 %v185, %v173
      %v188 = vadd.f32 %v186, 1e-05
      %v189 = vadd.f32 %v187, 1e-05
      %v190 = vrsqrt.pop %v188
      %v191 = vrsqrt.pop %v189
      %v192 = vmul.f32 %v176, %v190
      %v193 = vmul.f32 %v177, %v191
      %v194 = vld [vmem:[%s2] sm:$0x1]
      %v196 = vlaneseq
      %v197 = vshrl.u32 %v196, 7
      %v198 = vsub.s32 0, %v197
      %v199 = vrot.slane %v194, %v198
      %v201 = vmul.f32 %v192, %v199
      %v202 = vmul.f32 %v193, %v199
      %v203 = vld [vmem:[%s3] sm:$0x1]
      %v205 = vlaneseq
      %v206 = vshrl.u32 %v205, 7
      %v207 = vsub.s32 0, %v206
      %v208 = vrot.slane %v203, %v207
      %v210 = vadd.f32 %v201, %v208
      %v211 = vadd.f32 %v202, %v208
      %212 = vst.msk [vmem:[#allocation2] sm:$0xff] %vm75, %v210
      %213 = vst.msk [vmem:[#allocation2 + $0x8] sm:$0xff] %vm75, %v211
    $region41: #{tpu_custom_call.1} parent=1 // pred_fallthru
      _
    %v214 = vld [vmem:[#allocation2] sm:$0xff]
    %v215 = vld [vmem:[#allocation2 + $0x8] sm:$0xff]
    %v216 = vld [vmem:[#allocation8] sm:$0xff]
    %v217 = vld [vmem:[#allocation8 + $0x8] sm:$0xff]
    %v218 = vld [vmem:[#allocation8 + $0x10] sm:$0xff]
    %v219 = vld [vmem:[#allocation8 + $0x18] sm:$0xff]
    %v220 = vld [vmem:[%s5] sm:$0x1]
    %v222 = vlaneseq
    %v223 = vshrl.u32 %v222, 7
    %v224 = vsub.s32 0, %v223
    %v225 = vrot.slane %v220, %v224
    %vm227 = vcmask 261120
    %v229 = vsel %vm227, %v214, 0
    %v232 = vsel %vm227, %v215, 0
    %234 = vmatprep.subr.mxu0 0.0
    %235 = vmatpush1.msra.mxu0 %v216
    %236 = vmatprep.subr.mxu0 0.0
    %237 = vmatpush1.msra.mxu0 %v217
    %238 = vmatprep.subr.mxu0 0.0
    %239 = vmatpush1.msra.mxu0 %v218
    %240 = vmatprep.subr.mxu0 0.0
    %241 = vmatpush1.msra.mxu0 %v219
    %242 = vmatprep.subr.mxu0 0.0
    %243 = vmatpush1.msra.mxu0 0.0
    %244 = vmatprep.subr.mxu0 0.0
    %245 = vmatpush1.msra.mxu0 0.0
    %246 = vmatprep.subr.mxu0 0.0
    %247 = vmatpush1.msra.mxu0 0.0
    %248 = vmatprep.subr.mxu0 0.0
    %249 = vmatpush1.msra.mxu0 0.0
    %250 = vmatprep.subr.mxu0 0.0
    %251 = vmatpush1.msra.mxu0 0.0
    %252 = vmatprep.subr.mxu0 0.0
    %253 = vmatpush1.msra.mxu0 0.0
    %254 = vmatprep.subr.mxu0 0.0
    %255 = vmatpush1.msra.mxu0 0.0
    %256 = vmatprep.subr.mxu0 0.0
    %257 = vmatpush1.msra.mxu0 0.0
    %258 = vmatprep.subr.mxu0 0.0
    %259 = vmatpush1.msra.mxu0 0.0
    %260 = vmatprep.subr.mxu0 0.0
    %261 = vmatpush1.msra.mxu0 0.0
    %262 = vmatprep.subr.mxu0 0.0
    %263 = vmatpush1.msra.mxu0 0.0
    %264 = vmatprep.subr.mxu0 0.0
    %265 = vmatpush1.msra.mxu0 0.0
    %266 = vmatprep.subr.mxu0 0.0
    %267 = vmatpush1.msra.mxu0 0.0
    %268 = vmatprep.subr.mxu0 0.0
    %269 = vmatpush1.msra.mxu0 0.0
    %270 = vmatprep.subr.mxu0 0.0
    %271 = vmatpush1.msra.mxu0 0.0
    %272 = vmatprep.subr.mxu0 0.0
    %273 = vmatpush1.msra.mxu0 0.0
    %274 = vmatprep.subr.mxu0 0.0
    %275 = vmatpush1.msra.mxu0 0.0
    %276 = vmatprep.subr.mxu0 0.0
    %277 = vmatpush1.msra.mxu0 0.0
    %278 = vmatprep.subr.mxu0 0.0
    %279 = vmatpush1.msra.mxu0 0.0
    %280 = vmatprep.subr.mxu0 0.0
    %281 = vmatpush1.msra.mxu0 0.0
    %282 = vmatprep.subr.mxu0 0.0
    %283 = vmatpush1.msra.mxu0 0.0
    %284 = vmatprep.subr.mxu0 0.0
    %285 = vmatpush1.msra.mxu0 0.0
    %286 = vmatprep.subr.mxu0 0.0
    %287 = vmatpush1.msra.mxu0 0.0
    %288 = vmatprep.subr.mxu0 0.0
    %289 = vmatpush1.msra.mxu0 0.0
    %290 = vmatprep.subr.mxu0 0.0
    %291 = vmatpush1.msra.mxu0 0.0
    %292 = vmatprep.subr.mxu0 0.0
    %293 = vmatpush1.msra.mxu0 0.0
    %294 = vmatprep.subr.mxu0 0.0
    %295 = vmatpush1.msra.mxu0 0.0
    %296 = vmatprep.subr.mxu0 0.0
    %297 = vmatpush1.msra.mxu0 0.0
    %298 = vmatprep.mubr.f32.mxu0 0.0
    %299 = vmatmul.mubr.f32.gmra.mrb[0].mxu0 %v229
    %v300 = vpop.f32.mrb[0].mxu0
    %v301 = vadd.f32 %v225, %v300
    %v302 = vpop.f32.mrb[0].mxu0
    %303 = vmatprep.mubr.f32.mxu0 0.0
    %304 = vmatmul.mubr.f32.gmra.mrb[0].mxu0 %v232
    %v305 = vpop.f32.mrb[0].mxu0
    %v306 = vadd.f32 %v225, %v305
    %v307 = vpop.f32.mrb[0].mxu0
    %308 = vdwg.mxu0
    %309 = vst [vmem:[#allocation9] sm:$0xff] %v301
    %310 = vst [vmem:[#allocation9 + $0x8] sm:$0xff] %v306
    // Predicated region
    $region42: #{tpu_custom_call.1} parent=1 // pred_check
      _
    $region43: #{tpu_custom_call.1} parent=1 // pred_check_branch
      %312 = sbr.rel (0) target = $region45
    $region44: #{tpu_custom_call.1} parent=1 // pred_region
      %s314 = ssub.s32 256, 256
      %315 = vsyncadd [#allocation5], %s314
      %s316 = sshll.u32 [#allocation9], 4
      %s317 = int_to_ptr.vmem [resolvable:$true] %s316
      %322 = dma.vmem_to_hbm [thread:$0]  %s317, 256, %s6, [#allocation5], 128, 128, 8
    $region45: #{tpu_custom_call.1} parent=1 // pred_fallthru
      _
    // Predicated region
    $region46: #{tpu_custom_call.1} parent=1 // pred_check
      _
    $region47: #{tpu_custom_call.1} parent=1 // pred_check_branch
      %324 = sbr.rel (0) target = $region49
    $region48: #{tpu_custom_call.1} parent=1 // pred_region
      %325 = dma.done [#allocation5], 256
    $region49: #{tpu_custom_call.1} parent=1 // pred_fallthru
      _
    %326 = vsyncpa [#allocation4], 1
    %327 = vsyncpa [#allocation7], 1
    %328 = vsyncpa [#allocation5], 1

</llo_original>
